<compile_context>
chip_gen: v7x
topology: tpu7x:2x2x1
jax: 0.10.0
libtpu: 0.0.40
codegen_flags: <defaults>
</compile_context>

<pallas_src>
import functools

import jax
import jax.numpy as jnp
from jax.experimental import pallas as pl
from jax.experimental.pallas import tpu as pltpu


def _round_up(a, m):
    return (a + m - 1) // m * m


def _choose_tb(B, tb_max):
    """Pick the batch-tile size (always a multiple of 8)."""
    B8 = _round_up(B, 8)
    if B8 <= 2 * tb_max:
        # Small / medium batch: split into exactly 2 grid steps so both v7x
        # TensorCores get work (harmless on single-TC v5e/v6e). A single
        # sublane tile (B <= 8) stays as one step.
        if B8 <= 8:
            return 8
        return min(tb_max, _round_up((B8 + 1) // 2, 8))
    # Large batch: biggest tile (amortizes per-step overhead, lane-dense
    # output DMA) that keeps trailing-tile padding waste under ~12.5% of B.
    tb = tb_max
    while tb > 128 and (_round_up(B, tb) - B) * 8 > B:
        tb //= 2
    return tb


def _mlp_kernel(x_ref, w1_ref, b1_ref, w2_ref, b2_ref, w3_ref, b3_ref, o_ref):
    # x_ref: (TB, 9) bf16 activations (cast once in the wrapper).
    x = x_ref[...]

    # Layer 1: Linear(9, 512) + ReLU. Bias added post-accumulation in f32.
    # NOTE: at K=9 the MXU pass is badly underutilized; if profiling ever shows
    # the MXU as the binding slot, layer 1 can be moved to 9 broadcast VPU FMAs.
    h1 = jnp.dot(x, w1_ref[...], preferred_element_type=jnp.float32)
    h1 = jnp.maximum(h1 + b1_ref[...], 0.0)          # f32 VPU (v5e-safe)

    # Layer 2: Linear(512, 256) + ReLU.
    h2 = jnp.dot(h1.astype(jnp.bfloat16), w2_ref[...],
                 preferred_element_type=jnp.float32)
    h2 = jnp.maximum(h2 + b2_ref[...], 0.0)

    # Layer 3: Linear(256, 256), no activation.
    out = jnp.dot(h2.astype(jnp.bfloat16), w3_ref[...],
                  preferred_element_type=jnp.float32)
    o_ref[...] = (out + b3_ref[...]).astype(o_ref.dtype)


@functools.partial(jax.jit, static_argnames=("tb_max", "out_dtype"))
def net_forward(x, params, *, tb_max=2048, out_dtype=jnp.float32):
    """x: (B, 9) float32. params: dict w1,b1,w2,b2,w3,b3 (f32). Returns (B, 256)."""
    B, K = x.shape
    n_out = params["w3"].shape[1]

    # Weights as bf16 MXU operands; biases stay f32 for exact post-acc adds.
    w1 = params["w1"].astype(jnp.bfloat16)
    w2 = params["w2"].astype(jnp.bfloat16)
    w3 = params["w3"].astype(jnp.bfloat16)
    b1 = params["b1"].astype(jnp.float32)             # (1, 512)
    b2 = params["b2"].astype(jnp.float32)             # (1, 256)
    b3 = params["b3"].astype(jnp.float32)             # (1, 256)

    # Single cheap cast on the input path; no wrapper-side concat / extra HBM pass.
    x_bf = x.astype(jnp.bfloat16)

    TB = _choose_tb(B, tb_max)
    B_pad = _round_up(B, TB)
    if B_pad != B:
        x_bf = jnp.pad(x_bf, ((0, B_pad - B), (0, 0)))
    grid = (B_pad // TB,)

    flops = 2 * B_pad * (K * 512 + 512 * 256 + 256 * 256)
    bytes_accessed = (x_bf.size * 2
                      + (w1.size + w2.size + w3.size) * 2
                      + (b1.size + b2.size + b3.size) * 4
                      + B_pad * n_out * jnp.dtype(out_dtype).itemsize)

    def resident(shape):
        # Constant block index -> fetched once, stays VMEM-resident; a single
        # buffer is enough since the block never changes across grid steps.
        return pl.BlockSpec(shape, lambda i: (0, 0), pipeline_mode=pl.Buffered(1))

    out = pl.pallas_call(
        _mlp_kernel,
        out_shape=jax.ShapeDtypeStruct((B_pad, n_out), out_dtype),
        grid=grid,
        in_specs=[
            # Activations: batch-tiled -> pipelined / double-buffered.
            pl.BlockSpec((TB, K), lambda i: (i, 0)),
            resident(w1.shape), resident(b1.shape),
            resident(w2.shape), resident(b2.shape),
            resident(w3.shape), resident(b3.shape),
        ],
        out_specs=pl.BlockSpec((TB, n_out), lambda i: (i, 0)),
        compiler_params=pltpu.CompilerParams(
            dimension_semantics=("parallel",),   # megacore sharding on v7x
            # Per-step working set @ TB=2048: ~4 MiB double-buffered f32 output,
            # ~0.4 MiB single-buffered bf16 weights, ~11 MiB f32/bf16
            # intermediates -> ~16 MiB, comfortably under 32 MiB on all gens.
            vmem_limit_bytes=32 << 20,
        ),
        cost_estimate=pl.CostEstimate(
            flops=flops, transcendentals=0, bytes_accessed=bytes_accessed),
    )(x_bf, w1, b1, w2, b2, w3, b3)

    return out if B_pad == B else out[:B]


def init_params(key):
    """Deterministic init mimicking nn.Linear default: U(-1/sqrt(fan_in), +)."""
    dims = [(9, 512), (512, 256), (256, 256)]
    params = {}
    for i, (fan_in, fan_out) in enumerate(dims, start=1):
        key, kw, kb = jax.random.split(key, 3)
        bound = 1.0 / jnp.sqrt(float(fan_in))
        params[f"w{i}"] = jax.random.uniform(
            kw, (fan_in, fan_out), jnp.float32, minval=-bound, maxval=bound)
        params[f"b{i}"] = jax.random.uniform(
            kb, (1, fan_out), jnp.float32, minval=-bound, maxval=bound)
    return params


def _reference_forward(x, params):
    h1 = jnp.maximum(x @ params["w1"] + params["b1"], 0.0)
    h2 = jnp.maximum(h1 @ params["w2"] + params["b2"], 0.0)
    return h2 @ params["w3"] + params["b3"]


if __name__ == "__main__":
    key = jax.random.PRNGKey(0)
    key, kx1, kx2 = jax.random.split(key, 3)
    params = init_params(key)

    # Case 1: tiny batch -> single grid step (TB = 8).
    B1 = 8
    x1 = jax.random.normal(kx1, (B1, 9), dtype=jnp.float32)
    out1 = jax.block_until_ready(net_forward(x1, params))
    ref1 = _reference_forward(x1, params)
    assert out1.shape == (B1, 256), out1.shape
    # bf16 MXU operands with f32 accumulation -> relaxed tolerance vs f32 ref.
    assert jnp.allclose(out1, ref1, atol=3e-2, rtol=3e-2), "mismatch vs reference (B=8)"

    # Case 2: batch not a multiple of the tile -> padding + a 2-step grid
    # (exercises VMEM-resident single-buffered weights + 'parallel' split).
    B2 = 37
    x2 = jax.random.normal(kx2, (B2, 9), dtype=jnp.float32)
    out2 = jax.block_until_ready(net_forward(x2, params))
    ref2 = _reference_forward(x2, params)
    assert out2.shape == (B2, 256), out2.shape
    assert jnp.allclose(out2, ref2, atol=3e-2, rtol=3e-2), "mismatch vs reference (B=37)"

    print("KERNEL_OK")
</pallas_src>

<mosaic_0001>
module attributes {stable_mosaic.version = 11 : i64} {
  func.func @_mlp_kernel(%arg0: i32, %arg1: memref<8x9xbf16, #tpu.memory_space<vmem>>, %arg2: memref<9x512xbf16, #tpu.memory_space<vmem>>, %arg3: memref<1x512xf32, #tpu.memory_space<vmem>>, %arg4: memref<512x256xbf16, #tpu.memory_space<vmem>>, %arg5: memref<1x256xf32, #tpu.memory_space<vmem>>, %arg6: memref<256x256xbf16, #tpu.memory_space<vmem>>, %arg7: memref<1x256xf32, #tpu.memory_space<vmem>>, %arg8: memref<8x256xf32, #tpu.memory_space<vmem>>) attributes {dimension_semantics = [#tpu.dimension_semantics<parallel>], iteration_bounds = array<i64: 1>, scalar_prefetch = 0 : i64, scratch_operands = 0 : i64, tpu.core_type = #tpu.core_type<tc>, window_params = [{transform_indices = @transform_0, window_bounds = array<i64: 8, 9>}, {pipeline_mode = #tpu.pipeline_mode<synchronous>, transform_indices = @transform_1, window_bounds = array<i64: 9, 512>}, {pipeline_mode = #tpu.pipeline_mode<synchronous>, transform_indices = @transform_2, window_bounds = array<i64: 1, 512>}, {pipeline_mode = #tpu.pipeline_mode<synchronous>, transform_indices = @transform_3, window_bounds = array<i64: 512, 256>}, {pipeline_mode = #tpu.pipeline_mode<synchronous>, transform_indices = @transform_4, window_bounds = array<i64: 1, 256>}, {pipeline_mode = #tpu.pipeline_mode<synchronous>, transform_indices = @transform_5, window_bounds = array<i64: 256, 256>}, {pipeline_mode = #tpu.pipeline_mode<synchronous>, transform_indices = @transform_6, window_bounds = array<i64: 1, 256>}, {transform_indices = @transform_7, window_bounds = array<i64: 8, 256>}]} {
    %c0 = arith.constant 0 : index
    %c0_0 = arith.constant 0 : index
    %0 = vector.load %arg1[%c0, %c0_0] : memref<8x9xbf16, #tpu.memory_space<vmem>>, vector<8x9xbf16>
    %c0_1 = arith.constant 0 : index
    %c0_2 = arith.constant 0 : index
    %1 = vector.load %arg2[%c0_1, %c0_2] : memref<9x512xbf16, #tpu.memory_space<vmem>>, vector<9x512xbf16>
    %cst = arith.constant dense<0.000000e+00> : vector<8x512xf32>
    %2 = tpu.matmul %0, %1, %cst {dimension_numbers = #tpu.dot_dimension_numbers<[1], [0], [0], [1], [0, 0, 1, 1], [], []>} : vector<8x9xbf16>, vector<9x512xbf16>, vector<8x512xf32> -> vector<8x512xf32>
    %c0_3 = arith.constant 0 : index
    %c0_4 = arith.constant 0 : index
    %3 = vector.load %arg3[%c0_3, %c0_4] : memref<1x512xf32, #tpu.memory_space<vmem>>, vector<1x512xf32>
    %4 = vector.broadcast %3 : vector<1x512xf32> to vector<8x512xf32>
    %5 = arith.addf %2, %4 : vector<8x512xf32>
    %cst_5 = arith.constant 0.000000e+00 : f32
    %6 = vector.broadcast %cst_5 : f32 to vector<8x512xf32>
    %7 = arith.maximumf %5, %6 : vector<8x512xf32>
    %8 = arith.truncf %7 : vector<8x512xf32> to vector<8x512xbf16>
    %c0_6 = arith.constant 0 : index
    %c0_7 = arith.constant 0 : index
    %9 = vector.load %arg4[%c0_6, %c0_7] : memref<512x256xbf16, #tpu.memory_space<vmem>>, vector<512x256xbf16>
    %cst_8 = arith.constant dense<0.000000e+00> : vector<8x256xf32>
    %10 = tpu.matmul %8, %9, %cst_8 {dimension_numbers = #tpu.dot_dimension_numbers<[1], [0], [0], [1], [0, 0, 1, 1], [], []>} : vector<8x512xbf16>, vector<512x256xbf16>, vector<8x256xf32> -> vector<8x256xf32>
    %c0_9 = arith.constant 0 : index
    %c0_10 = arith.constant 0 : index
    %11 = vector.load %arg5[%c0_9, %c0_10] : memref<1x256xf32, #tpu.memory_space<vmem>>, vector<1x256xf32>
    %12 = vector.broadcast %11 : vector<1x256xf32> to vector<8x256xf32>
    %13 = arith.addf %10, %12 : vector<8x256xf32>
    %cst_11 = arith.constant 0.000000e+00 : f32
    %14 = vector.broadcast %cst_11 : f32 to vector<8x256xf32>
    %15 = arith.maximumf %13, %14 : vector<8x256xf32>
    %16 = arith.truncf %15 : vector<8x256xf32> to vector<8x256xbf16>
    %c0_12 = arith.constant 0 : index
    %c0_13 = arith.constant 0 : index
    %17 = vector.load %arg6[%c0_12, %c0_13] : memref<256x256xbf16, #tpu.memory_space<vmem>>, vector<256x256xbf16>
    %cst_14 = arith.constant dense<0.000000e+00> : vector<8x256xf32>
    %18 = tpu.matmul %16, %17, %cst_14 {dimension_numbers = #tpu.dot_dimension_numbers<[1], [0], [0], [1], [0, 0, 1, 1], [], []>} : vector<8x256xbf16>, vector<256x256xbf16>, vector<8x256xf32> -> vector<8x256xf32>
    %c0_15 = arith.constant 0 : index
    %c0_16 = arith.constant 0 : index
    %19 = vector.load %arg7[%c0_15, %c0_16] : memref<1x256xf32, #tpu.memory_space<vmem>>, vector<1x256xf32>
    %20 = vector.broadcast %19 : vector<1x256xf32> to vector<8x256xf32>
    %21 = arith.addf %18, %20 : vector<8x256xf32>
    %c0_17 = arith.constant 0 : index
    %c0_18 = arith.constant 0 : index
    %22 = vector.load %arg8[%c0_17, %c0_18] : memref<8x256xf32, #tpu.memory_space<vmem>>, vector<8x256xf32>
    tpu.vector_store %arg8[%c0_17, %c0_18], %21 {strides = array<i32>} : memref<8x256xf32, #tpu.memory_space<vmem>>, vector<8x256xf32>,
    return
  }
  func.func @transform_0(%arg0: i32) -> (i32, i32) {
    %c0_i32 = arith.constant 0 : i32
    %c0_i32_0 = arith.constant 0 : i32
    return %arg0, %c0_i32 : i32, i32
  }
  func.func @transform_1(%arg0: i32) -> (i32, i32) {
    %c0_i32 = arith.constant 0 : i32
    %c0_i32_0 = arith.constant 0 : i32
    %c0_i32_1 = arith.constant 0 : i32
    return %c0_i32, %c0_i32_0 : i32, i32
  }
  func.func @transform_2(%arg0: i32) -> (i32, i32) {
    %c0_i32 = arith.constant 0 : i32
    %c0_i32_0 = arith.constant 0 : i32
    %c0_i32_1 = arith.constant 0 : i32
    return %c0_i32, %c0_i32_0 : i32, i32
  }
  func.func @transform_3(%arg0: i32) -> (i32, i32) {
    %c0_i32 = arith.constant 0 : i32
    %c0_i32_0 = arith.constant 0 : i32
    %c0_i32_1 = arith.constant 0 : i32
    return %c0_i32, %c0_i32_0 : i32, i32
  }
  func.func @transform_4(%arg0: i32) -> (i32, i32) {
    %c0_i32 = arith.constant 0 : i32
    %c0_i32_0 = arith.constant 0 : i32
    %c0_i32_1 = arith.constant 0 : i32
    return %c0_i32, %c0_i32_0 : i32, i32
  }
  func.func @transform_5(%arg0: i32) -> (i32, i32) {
    %c0_i32 = arith.constant 0 : i32
    %c0_i32_0 = arith.constant 0 : i32
    %c0_i32_1 = arith.constant 0 : i32
    return %c0_i32, %c0_i32_0 : i32, i32
  }
  func.func @transform_6(%arg0: i32) -> (i32, i32) {
    %c0_i32 = arith.constant 0 : i32
    %c0_i32_0 = arith.constant 0 : i32
    %c0_i32_1 = arith.constant 0 : i32
    return %c0_i32, %c0_i32_0 : i32, i32
  }
  func.func @transform_7(%arg0: i32) -> (i32, i32) {
    %c0_i32 = arith.constant 0 : i32
    %c0_i32_0 = arith.constant 0 : i32
    return %arg0, %c0_i32 : i32, i32
  }
}

</mosaic_0001>

<llo_original>
// kernel: net_forward.1
$region0: #{net_forward.1}
  #allocation0 [shape = 'u32[]', space=smem, size = 0x4, offset = 0x4, fixed_abs, tag = 'smem constant byte address 0x4 - core index']
  #allocation1 [shape = 'u32[144,128]{1,0:T(1,128)}', space=vmem, size = 0x12000, scoped, tag = 'internal scratch']
  %s0 = inlined_call_operand.vmem [shape: bf16[8,9], index: 0, kind: input, shape index: {}]
  %s1 = inlined_call_operand.vmem [shape: bf16[9,512], index: 1, kind: input, shape index: {}]
  %s2 = inlined_call_operand.vmem [shape: f32[1,512], index: 2, kind: input, shape index: {}]
  %s3 = inlined_call_operand.vmem [shape: bf16[512,256], index: 3, kind: input, shape index: {}]
  %s4 = inlined_call_operand.vmem [shape: f32[1,256], index: 4, kind: input, shape index: {}]
  %s5 = inlined_call_operand.vmem [shape: bf16[256,256], index: 5, kind: input, shape index: {}]
  %s6 = inlined_call_operand.vmem [shape: f32[1,256], index: 6, kind: input, shape index: {}]
  %s7 = inlined_call_operand.hbm [shape: f32[8,256], index: 7, kind: output, shape index: {}]
  %s8 = sld [smem:[#allocation0]]
  $region38: #{net_forward.1} parent=0
    _
  %s10 = ssub.s32 1, %s8
  %s11 = scalar_select 0, %s10, %s8
  $region1: #{net_forward.1} parent=0
    #allocation2 [shape = 'u8[8192]{0}', space=vmem, size = 0x2000, scoped, tag = 'output window, operand 0, single buffered']
    #allocation3 [shape = 's32[1]{0}', space=sflag, size = 0x4, scoped, tag = 'scoped memory for net_forward.1']
    %12 = vsyncpa [#allocation3], 0
    // Predicated region
    $region2: #{net_forward.1} parent=1 // pred_check
      _
    $region3: #{net_forward.1} parent=1 // pred_check_branch
      %14 = sbr.rel (0) target = $region5
    $region4: #{net_forward.1} parent=1 // pred_region
      _
    $region5: #{net_forward.1} parent=1 // pred_fallthru
      _
    // Predicated region
    $region6: #{net_forward.1} parent=1 // pred_check
      _
    $region7: #{net_forward.1} parent=1 // pred_check_branch
      %16 = sbr.rel (0) target = $region9
    $region8: #{net_forward.1} parent=1 // pred_region
      _
    $region9: #{net_forward.1} parent=1 // pred_fallthru
      _
    // Predicated region
    $region10: #{net_forward.1} parent=1 // pred_check
      _
    $region11: #{net_forward.1} parent=1 // pred_check_branch
      %18 = sbr.rel (0) target = $region13
    $region12: #{net_forward.1} parent=1 // pred_region
      _
    $region13: #{net_forward.1} parent=1 // pred_fallthru
      _
    // Predicated region
    $region14: #{net_forward.1} parent=1 // pred_check
      _
    $region15: #{net_forward.1} parent=1 // pred_check_branch
      %20 = sbr.rel (0) target = $region17
    $region16: #{net_forward.1} parent=1 // pred_region
      _
    $region17: #{net_forward.1} parent=1 // pred_fallthru
      _
    // Predicated region
    $region18: #{net_forward.1} parent=1 // pred_check
      _
    $region19: #{net_forward.1} parent=1 // pred_check_branch
      %22 = sbr.rel (0) target = $region21
    $region20: #{net_forward.1} parent=1 // pred_region
      _
    $region21: #{net_forward.1} parent=1 // pred_fallthru
      _
    // Predicated region
    $region22: #{net_forward.1} parent=1 // pred_check
      _
    $region23: #{net_forward.1} parent=1 // pred_check_branch
      %24 = sbr.rel (0) target = $region25
    $region24: #{net_forward.1} parent=1 // pred_region
      _
    $region25: #{net_forward.1} parent=1 // pred_fallthru
      _
    // Predicated region
    $region26: #{net_forward.1} parent=1 // pred_check
      _
    $region27: #{net_forward.1} parent=1 // pred_check_branch
      %26 = sbr.rel (0) target = $region29
    $region28: #{net_forward.1} parent=1 // pred_region
      _
    $region29: #{net_forward.1} parent=1 // pred_fallthru
      _
    %v28 = vld [vmem:[%s0] sm:$0xf]
    %v29 = vld [vmem:[%s1] sm:$0xff]
    %v30 = vld [vmem:[%s1 + $0x8] sm:$0xff]
    %v31 = vld [vmem:[%s1 + $0x10] sm:$0x11]
    %v32 = vld [vmem:[%s1 + $0x18] sm:$0x11]
    %v33 = vld [vmem:[%s2] sm:$0xf]
    %v35 = vlaneseq
    %v36 = vshrl.u32 %v35, 7
    %v37 = vsub.s32 0, %v36
    %v38 = vrot.slane %v33, %v37
    %v39 = vlaneseq
    %v40 = vshrl.u32 %v39, 7
    %v41 = vsub.s32 1, %v40
    %v42 = vrot.slane %v33, %v41
    %v43 = vlaneseq
    %v44 = vshrl.u32 %v43, 7
    %v45 = vsub.s32 2, %v44
    %v46 = vrot.slane %v33, %v45
    %v47 = vlaneseq
    %v48 = vshrl.u32 %v47, 7
    %v49 = vsub.s32 3, %v48
    %v50 = vrot.slane %v33, %v49
    %v59 = vunpack.c.l.b16 %v29
    %v60 = vunpack.c.h.b16 %v29
    %v61 = vunpack.c.l.b16 %v30
    %v62 = vunpack.c.h.b16 %v30
    %v63 = vunpack.c.l.b16 %v31
    %v64 = vunpack.c.h.b16 %v31
    %v65 = vunpack.c.l.b16 %v32
    %v66 = vunpack.c.h.b16 %v32
    %v67 = vpack.c.b16 %v63, %v59
    %v68 = vpack.c.b16 %v64, %v60
    %v69 = vpack.c.b16 %v65, %v61
    %v70 = vpack.c.b16 %v66, %v62
    %vm71 = vcmask 72704
    %v73 = vsel %vm71, %v28, 0
    %vm75 = vcmask 1043456
    %vm76 = vcmask 1044480
    %v77 = vsel %vm75, 4294967295, 65535
    %v78 = vsel %vm76, %v77, 0
    %v80 = vand.u32 %v67, %v78
    %v83 = vand.u32 %v68, %v78
    %v86 = vand.u32 %v69, %v78
    %v89 = vand.u32 %v70, %v78
    %91 = vmatprep.subr.bf16.mxu0 %v83
    %92 = vmatpush1.bf16.msra.mxu0 %v80
    %93 = vmatprep.subr.bf16.mxu0 0
    %94 = vmatpush1.bf16.msra.mxu0 0
    %95 = vmatprep.subr.bf16.mxu0 0
    %96 = vmatpush1.bf16.msra.mxu0 0
    %97 = vmatprep.subr.bf16.mxu0 0
    %98 = vmatpush1.bf16.msra.mxu0 0
    %99 = vmatprep.subr.bf16.mxu0 0
    %100 = vmatpush1.bf16.msra.mxu0 0
    %101 = vmatprep.subr.bf16.mxu0 0
    %102 = vmatpush1.bf16.msra.mxu0 0
    %103 = vmatprep.subr.bf16.mxu0 0
    %104 = vmatpush1.bf16.msra.mxu0 0
    %105 = vmatprep.subr.bf16.mxu0 0
    %106 = vmatpush1.bf16.msra.mxu0 0
    %107 = vmatprep.subr.bf16.mxu0 0
    %108 = vmatpush1.bf16.msra.mxu0 0
    %109 = vmatprep.subr.bf16.mxu0 0
    %110 = vmatpush1.bf16.msra.mxu0 0
    %111 = vmatprep.subr.bf16.mxu0 0
    %112 = vmatpush1.bf16.msra.mxu0 0
    %113 = vmatprep.subr.bf16.mxu0 0
    %114 = vmatpush1.bf16.msra.mxu0 0
    %115 = vmatprep.subr.bf16.mxu0 0
    %116 = vmatpush1.bf16.msra.mxu0 0
    %117 = vmatprep.subr.bf16.mxu0 0
    %118 = vmatpush1.bf16.msra.mxu0 0
    %119 = vmatprep.subr.bf16.mxu0 0
    %120 = vmatpush1.bf16.msra.mxu0 0
    %121 = vmatprep.subr.bf16.mxu0 0
    %122 = vmatpush1.bf16.msra.mxu0 0
    %123 = vmatprep.mubr.bf16.mxu0 0
    %124 = vmatmul.mubr.bf16.gmra.mrb[0].mxu0 %v73
    %v125 = vpop.f32.mrb[0].mxu0
    %v126 = vadd.f32 %v38, %v125
    %v127 = vpop.f32.mrb[0].mxu0
    %v128 = vadd.f32 %v42, %v127
    %v129 = vpop.f32.mrb[0].mxu0
    %v130 = vpop.f32.mrb[0].mxu0
    %131 = vdwg.mxu0
    %132 = vmatprep.subr.bf16.mxu0 %v89
    %133 = vmatpush1.bf16.msra.mxu0 %v86
    %134 = vmatprep.subr.bf16.mxu0 0
    %135 = vmatpush1.bf16.msra.mxu0 0
    %136 = vmatprep.subr.bf16.mxu0 0
    %137 = vmatpush1.bf16.msra.mxu0 0
    %138 = vmatprep.subr.bf16.mxu0 0
    %139 = vmatpush1.bf16.msra.mxu0 0
    %140 = vmatprep.subr.bf16.mxu0 0
    %141 = vmatpush1.bf16.msra.mxu0 0
    %142 = vmatprep.subr.bf16.mxu0 0
    %143 = vmatpush1.bf16.msra.mxu0 0
    %144 = vmatprep.subr.bf16.mxu0 0
    %145 = vmatpush1.bf16.msra.mxu0 0
    %146 = vmatprep.subr.bf16.mxu0 0
    %147 = vmatpush1.bf16.msra.mxu0 0
    %148 = vmatprep.subr.bf16.mxu0 0
    %149 = vmatpush1.bf16.msra.mxu0 0
    %150 = vmatprep.subr.bf16.mxu0 0
    %151 = vmatpush1.bf16.msra.mxu0 0
    %152 = vmatprep.subr.bf16.mxu0 0
    %153 = vmatpush1.bf16.msra.mxu0 0
    %154 = vmatprep.subr.bf16.mxu0 0
    %155 = vmatpush1.bf16.msra.mxu0 0
    %156 = vmatprep.subr.bf16.mxu0 0
    %157 = vmatpush1.bf16.msra.mxu0 0
    %158 = vmatprep.subr.bf16.mxu0 0
    %159 = vmatpush1.bf16.msra.mxu0 0
    %160 = vmatprep.subr.bf16.mxu0 0
    %161 = vmatpush1.bf16.msra.mxu0 0
    %162 = vmatprep.subr.bf16.mxu0 0
    %163 = vmatpush1.bf16.msra.mxu0 0
    %164 = vmatprep.mubr.bf16.mxu0 0
    %165 = vmatmul.mubr.bf16.gmra.mrb[0].mxu0 %v73
    %v166 = vpop.f32.mrb[0].mxu0
    %v167 = vadd.f32 %v46, %v166
    %v168 = vpop.f32.mrb[0].mxu0
    %v169 = vadd.f32 %v50, %v168
    %v170 = vpop.f32.mrb[0].mxu0
    %v171 = vpop.f32.mrb[0].mxu0
    %172 = vdwg.mxu0
    %v173 = vmax.f32 %v126, 0.0
    %v174 = vmax.f32 %v128, 0.0
    %v175 = vmax.f32 %v167, 0.0
    %v176 = vmax.f32 %v169, 0.0
    %v177 = vpack.c.bf16 %v173, %v173
    %v178 = vpack.c.bf16 %v174, %v174
    %v179 = vpack.c.bf16 %v175, %v175
    %v180 = vpack.c.bf16 %v176, %v176
    %v181 = vld [vmem:[%s3] sm:$0xff]
    %v182 = vld [vmem:[%s3 + $0x8] sm:$0xff]
    %v183 = vld [vmem:[%s3 + $0x10] sm:$0xff]
    %v184 = vld [vmem:[%s3 + $0x18] sm:$0xff]
    %v185 = vld [vmem:[%s3 + $0x20] sm:$0xff]
    %v186 = vld [vmem:[%s3 + $0x28] sm:$0xff]
    %v187 = vld [vmem:[%s3 + $0x30] sm:$0xff]
    %v188 = vld [vmem:[%s3 + $0x38] sm:$0xff]
    %v189 = vld [vmem:[%s3 + $0x40] sm:$0xff]
    %v190 = vld [vmem:[%s3 + $0x48] sm:$0xff]
    %v191 = vld [vmem:[%s3 + $0x50] sm:$0xff]
    %v192 = vld [vmem:[%s3 + $0x58] sm:$0xff]
    %v193 = vld [vmem:[%s3 + $0x60] sm:$0xff]
    %v194 = vld [vmem:[%s3 + $0x68] sm:$0xff]
    %v195 = vld [vmem:[%s3 + $0x70] sm:$0xff]
    %v196 = vld [vmem:[%s3 + $0x78] sm:$0xff]
    %v197 = vld [vmem:[%s3 + $0x80] sm:$0xff]
    %v198 = vld [vmem:[%s3 + $0x88] sm:$0xff]
    %v199 = vld [vmem:[%s3 + $0x90] sm:$0xff]
    %v200 = vld [vmem:[%s3 + $0x98] sm:$0xff]
    %v201 = vld [vmem:[%s3 + $0xa0] sm:$0xff]
    %v202 = vld [vmem:[%s3 + $0xa8] sm:$0xff]
    %v203 = vld [vmem:[%s3 + $0xb0] sm:$0xff]
    %v204 = vld [vmem:[%s3 + $0xb8] sm:$0xff]
    %v205 = vld [vmem:[%s3 + $0xc0] sm:$0xff]
    %v206 = vld [vmem:[%s3 + $0xc8] sm:$0xff]
    %v207 = vld [vmem:[%s3 + $0xd0] sm:$0xff]
    %v208 = vld [vmem:[%s3 + $0xd8] sm:$0xff]
    %v209 = vld [vmem:[%s3 + $0xe0] sm:$0xff]
    %v210 = vld [vmem:[%s3 + $0xe8] sm:$0xff]
    %v211 = vld [vmem:[%s3 + $0xf0] sm:$0xff]
    %v212 = vld [vmem:[%s3 + $0xf8] sm:$0xff]
    %v213 = vld [vmem:[%s3 + $0x100] sm:$0xff]
    %v214 = vld [vmem:[%s3 + $0x108] sm:$0xff]
    %v215 = vld [vmem:[%s3 + $0x110] sm:$0xff]
    %v216 = vld [vmem:[%s3 + $0x118] sm:$0xff]
    %v217 = vld [vmem:[%s3 + $0x120] sm:$0xff]
    %v218 = vld [vmem:[%s3 + $0x128] sm:$0xff]
    %v219 = vld [vmem:[%s3 + $0x130] sm:$0xff]
    %v220 = vld [vmem:[%s3 + $0x138] sm:$0xff]
    %v221 = vld [vmem:[%s3 + $0x140] sm:$0xff]
    %v222 = vld [vmem:[%s3 + $0x148] sm:$0xff]
    %v223 = vld [vmem:[%s3 + $0x150] sm:$0xff]
    %v224 = vld [vmem:[%s3 + $0x158] sm:$0xff]
    %v225 = vld [vmem:[%s3 + $0x160] sm:$0xff]
    %v226 = vld [vmem:[%s3 + $0x168] sm:$0xff]
    %v227 = vld [vmem:[%s3 + $0x170] sm:$0xff]
    %v228 = vld [vmem:[%s3 + $0x178] sm:$0xff]
    %v229 = vld [vmem:[%s3 + $0x180] sm:$0xff]
    %v230 = vld [vmem:[%s3 + $0x188] sm:$0xff]
    %v231 = vld [vmem:[%s3 + $0x190] sm:$0xff]
    %v232 = vld [vmem:[%s3 + $0x198] sm:$0xff]
    %v233 = vld [vmem:[%s3 + $0x1a0] sm:$0xff]
    %v234 = vld [vmem:[%s3 + $0x1a8] sm:$0xff]
    %v235 = vld [vmem:[%s3 + $0x1b0] sm:$0xff]
    %v236 = vld [vmem:[%s3 + $0x1b8] sm:$0xff]
    %v237 = vld [vmem:[%s3 + $0x1c0] sm:$0xff]
    %v238 = vld [vmem:[%s3 + $0x1c8] sm:$0xff]
    %v239 = vld [vmem:[%s3 + $0x1d0] sm:$0xff]
    %v240 = vld [vmem:[%s3 + $0x1d8] sm:$0xff]
    %v241 = vld [vmem:[%s3 + $0x1e0] sm:$0xff]
    %v242 = vld [vmem:[%s3 + $0x1e8] sm:$0xff]
    %v243 = vld [vmem:[%s3 + $0x1f0] sm:$0xff]
    %v244 = vld [vmem:[%s3 + $0x1f8] sm:$0xff]
    %v245 = vld [vmem:[%s4] sm:$0x3]
    %v247 = vlaneseq
    %v248 = vshrl.u32 %v247, 7
    %v249 = vsub.s32 0, %v248
    %v250 = vrot.slane %v245, %v249
    %v251 = vlaneseq
    %v252 = vshrl.u32 %v251, 7
    %v253 = vsub.s32 1, %v252
    %v254 = vrot.slane %v245, %v253
    %v321 = vunpack.c.l.b16 %v181
    %v322 = vunpack.c.h.b16 %v181
    %v323 = vunpack.c.l.b16 %v182
    %v324 = vunpack.c.h.b16 %v182
    %v325 = vunpack.c.l.b16 %v183
    %v326 = vunpack.c.h.b16 %v183
    %v327 = vunpack.c.l.b16 %v184
    %v328 = vunpack.c.h.b16 %v184
    %v329 = vunpack.c.l.b16 %v185
    %v330 = vunpack.c.h.b16 %v185
    %v331 = vunpack.c.l.b16 %v186
    %v332 = vunpack.c.h.b16 %v186
    %v333 = vunpack.c.l.b16 %v187
    %v334 = vunpack.c.h.b16 %v187
    %v335 = vunpack.c.l.b16 %v188
    %v336 = vunpack.c.h.b16 %v188
    %v337 = vunpack.c.l.b16 %v189
    %v338 = vunpack.c.h.b16 %v189
    %v339 = vunpack.c.l.b16 %v190
    %v340 = vunpack.c.h.b16 %v190
    %v341 = vunpack.c.l.b16 %v191
    %v342 = vunpack.c.h.b16 %v191
    %v343 = vunpack.c.l.b16 %v192
    %v344 = vunpack.c.h.b16 %v192
    %v345 = vunpack.c.l.b16 %v193
    %v346 = vunpack.c.h.b16 %v193
    %v347 = vunpack.c.l.b16 %v194
    %v348 = vunpack.c.h.b16 %v194
    %v349 = vunpack.c.l.b16 %v195
    %v350 = vunpack.c.h.b16 %v195
    %v351 = vunpack.c.l.b16 %v196
    %v352 = vunpack.c.h.b16 %v196
    %v353 = vunpack.c.l.b16 %v197
    %v354 = vunpack.c.h.b16 %v197
    %v355 = vunpack.c.l.b16 %v198
    %v356 = vunpack.c.h.b16 %v198
    %v357 = vunpack.c.l.b16 %v199
    %v358 = vunpack.c.h.b16 %v199
    %v359 = vunpack.c.l.b16 %v200
    %v360 = vunpack.c.h.b16 %v200
    %v361 = vunpack.c.l.b16 %v201
    %v362 = vunpack.c.h.b16 %v201
    %v363 = vunpack.c.l.b16 %v202
    %v364 = vunpack.c.h.b16 %v202
    %v365 = vunpack.c.l.b16 %v203
    %v366 = vunpack.c.h.b16 %v203
    %v367 = vunpack.c.l.b16 %v204
    %v368 = vunpack.c.h.b16 %v204
    %v369 = vunpack.c.l.b16 %v205
    %v370 = vunpack.c.h.b16 %v205
    %v371 = vunpack.c.l.b16 %v206
    %v372 = vunpack.c.h.b16 %v206
    %v373 = vunpack.c.l.b16 %v207
    %v374 = vunpack.c.h.b16 %v207
    %v375 = vunpack.c.l.b16 %v208
    %v376 = vunpack.c.h.b16 %v208
    %v377 = vunpack.c.l.b16 %v209
    %v378 = vunpack.c.h.b16 %v209
    %v379 = vunpack.c.l.b16 %v210
    %v380 = vunpack.c.h.b16 %v210
    %v381 = vunpack.c.l.b16 %v211
    %v382 = vunpack.c.h.b16 %v211
    %v383 = vunpack.c.l.b16 %v212
    %v384 = vunpack.c.h.b16 %v212
    %v385 = vunpack.c.l.b16 %v213
    %v386 = vunpack.c.h.b16 %v213
    %v387 = vunpack.c.l.b16 %v214
    %v388 = vunpack.c.h.b16 %v214
    %v389 = vunpack.c.l.b16 %v215
    %v390 = vunpack.c.h.b16 %v215
    %v391 = vunpack.c.l.b16 %v216
    %v392 = vunpack.c.h.b16 %v216
    %v393 = vunpack.c.l.b16 %v217
    %v394 = vunpack.c.h.b16 %v217
    %v395 = vunpack.c.l.b16 %v218
    %v396 = vunpack.c.h.b16 %v218
    %v397 = vunpack.c.l.b16 %v219
    %v398 = vunpack.c.h.b16 %v219
    %v399 = vunpack.c.l.b16 %v220
    %v400 = vunpack.c.h.b16 %v220
    %v401 = vunpack.c.l.b16 %v221
    %v402 = vunpack.c.h.b16 %v221
    %v403 = vunpack.c.l.b16 %v222
    %v404 = vunpack.c.h.b16 %v222
    %v405 = vunpack.c.l.b16 %v223
    %v406 = vunpack.c.h.b16 %v223
    %v407 = vunpack.c.l.b16 %v224
    %v408 = vunpack.c.h.b16 %v224
    %v409 = vunpack.c.l.b16 %v225
    %v410 = vunpack.c.h.b16 %v225
    %v411 = vunpack.c.l.b16 %v226
    %v412 = vunpack.c.h.b16 %v226
    %v413 = vunpack.c.l.b16 %v227
    %v414 = vunpack.c.h.b16 %v227
    %v415 = vunpack.c.l.b16 %v228
    %v416 = vunpack.c.h.b16 %v228
    %v417 = vunpack.c.l.b16 %v229
    %v418 = vunpack.c.h.b16 %v229
    %v419 = vunpack.c.l.b16 %v230
    %v420 = vunpack.c.h.b16 %v230
    %v421 = vunpack.c.l.b16 %v231
    %v422 = vunpack.c.h.b16 %v231
    %v423 = vunpack.c.l.b16 %v232
    %v424 = vunpack.c.h.b16 %v232
    %v425 = vunpack.c.l.b16 %v233
    %v426 = vunpack.c.h.b16 %v233
    %v427 = vunpack.c.l.b16 %v234
    %v428 = vunpack.c.h.b16 %v234
    %v429 = vunpack.c.l.b16 %v235
    %v430 = vunpack.c.h.b16 %v235
    %v431 = vunpack.c.l.b16 %v236
    %v432 = vunpack.c.h.b16 %v236
    %v433 = vunpack.c.l.b16 %v237
    %v434 = vunpack.c.h.b16 %v237
    %v435 = vunpack.c.l.b16 %v238
    %v436 = vunpack.c.h.b16 %v238
    %v437 = vunpack.c.l.b16 %v239
    %v438 = vunpack.c.h.b16 %v239
    %v439 = vunpack.c.l.b16 %v240
    %v440 = vunpack.c.h.b16 %v240
    %v441 = vunpack.c.l.b16 %v241
    %v442 = vunpack.c.h.b16 %v241
    %v443 = vunpack.c.l.b16 %v242
    %v444 = vunpack.c.h.b16 %v242
    %v445 = vunpack.c.l.b16 %v243
    %v446 = vunpack.c.h.b16 %v243
    %v447 = vunpack.c.l.b16 %v244
    %v448 = vunpack.c.h.b16 %v244
    %v449 = vpack.c.b16 %v323, %v321
    %v450 = vpack.c.b16 %v324, %v322
    %v451 = vpack.c.b16 %v327, %v325
    %v452 = vpack.c.b16 %v328, %v326
    %v453 = vpack.c.b16 %v331, %v329
    %v454 = vpack.c.b16 %v332, %v330
    %v455 = vpack.c.b16 %v335, %v333
    %v456 = vpack.c.b16 %v336, %v334
    %v457 = vpack.c.b16 %v339, %v337
    %v458 = vpack.c.b16 %v340, %v338
    %v459 = vpack.c.b16 %v343, %v341
    %v460 = vpack.c.b16 %v344, %v342
    %v461 = vpack.c.b16 %v347, %v345
    %v462 = vpack.c.b16 %v348, %v346
    %v463 = vpack.c.b16 %v351, %v349
    %v464 = vpack.c.b16 %v352, %v350
    %v465 = vpack.c.b16 %v355, %v353
    %v466 = vpack.c.b16 %v356, %v354
    %v467 = vpack.c.b16 %v359, %v357
    %v468 = vpack.c.b16 %v360, %v358
    %v469 = vpack.c.b16 %v363, %v361
    %v470 = vpack.c.b16 %v364, %v362
    %v471 = vpack.c.b16 %v367, %v365
    %v472 = vpack.c.b16 %v368, %v366
    %v473 = vpack.c.b16 %v371, %v369
    %v474 = vpack.c.b16 %v372, %v370
    %v475 = vpack.c.b16 %v375, %v373
    %v476 = vpack.c.b16 %v376, %v374
    %v477 = vpack.c.b16 %v379, %v377
    %v478 = vpack.c.b16 %v380, %v378
    %v479 = vpack.c.b16 %v383, %v381
    %v480 = vpack.c.b16 %v384, %v382
    %v481 = vpack.c.b16 %v387, %v385
    %v482 = vpack.c.b16 %v388, %v386
    %v483 = vpack.c.b16 %v391, %v389
    %v484 = vpack.c.b16 %v392, %v390
    %v485 = vpack.c.b16 %v395, %v393
    %v486 = vpack.c.b16 %v396, %v394
    %v487 = vpack.c.b16 %v399, %v397
    %v488 = vpack.c.b16 %v400, %v398
    %v489 = vpack.c.b16 %v403, %v401
    %v490 = vpack.c.b16 %v404, %v402
    %v491 = vpack.c.b16 %v407, %v405
    %v492 = vpack.c.b16 %v408, %v406
    %v493 = vpack.c.b16 %v411, %v409
    %v494 = vpack.c.b16 %v412, %v410
    %v495 = vpack.c.b16 %v415, %v413
    %v496 = vpack.c.b16 %v416, %v414
    %v497 = vpack.c.b16 %v419, %v417
    %v498 = vpack.c.b16 %v420, %v418
    %v499 = vpack.c.b16 %v423, %v421
    %v500 = vpack.c.b16 %v424, %v422
    %v501 = vpack.c.b16 %v427, %v425
    %v502 = vpack.c.b16 %v428, %v426
    %v503 = vpack.c.b16 %v431, %v429
    %v504 = vpack.c.b16 %v432, %v430
    %v505 = vpack.c.b16 %v435, %v433
    %v506 = vpack.c.b16 %v436, %v434
    %v507 = vpack.c.b16 %v439, %v437
    %v508 = vpack.c.b16 %v440, %v438
    %v509 = vpack.c.b16 %v443, %v441
    %v510 = vpack.c.b16 %v444, %v442
    %v511 = vpack.c.b16 %v447, %v445
    %v512 = vpack.c.b16 %v448, %v446
    %577 = vmatprep.subr.bf16.mxu0 %v450
    %578 = vmatpush1.bf16.msra.mxu0 %v449
    %579 = vmatprep.subr.bf16.mxu0 %v452
    %580 = vmatpush1.bf16.msra.mxu0 %v451
    %581 = vmatprep.subr.bf16.mxu0 %v454
    %582 = vmatpush1.bf16.msra.mxu0 %v453
    %583 = vmatprep.subr.bf16.mxu0 %v456
    %584 = vmatpush1.bf16.msra.mxu0 %v455
    %585 = vmatprep.subr.bf16.mxu0 %v458
    %586 = vmatpush1.bf16.msra.mxu0 %v457
    %587 = vmatprep.subr.bf16.mxu0 %v460
    %588 = vmatpush1.bf16.msra.mxu0 %v459
    %589 = vmatprep.subr.bf16.mxu0 %v462
    %590 = vmatpush1.bf16.msra.mxu0 %v461
    %591 = vmatprep.subr.bf16.mxu0 %v464
    %592 = vmatpush1.bf16.msra.mxu0 %v463
    %593 = vmatprep.subr.bf16.mxu0 %v466
    %594 = vmatpush1.bf16.msra.mxu0 %v465
    %595 = vmatprep.subr.bf16.mxu0 %v468
    %596 = vmatpush1.bf16.msra.mxu0 %v467
    %597 = vmatprep.subr.bf16.mxu0 %v470
    %598 = vmatpush1.bf16.msra.mxu0 %v469
    %599 = vmatprep.subr.bf16.mxu0 %v472
    %600 = vmatpush1.bf16.msra.mxu0 %v471
    %601 = vmatprep.subr.bf16.mxu0 %v474
    %602 = vmatpush1.bf16.msra.mxu0 %v473
    %603 = vmatprep.subr.bf16.mxu0 %v476
    %604 = vmatpush1.bf16.msra.mxu0 %v475
    %605 = vmatprep.subr.bf16.mxu0 %v478
    %606 = vmatpush1.bf16.msra.mxu0 %v477
    %607 = vmatprep.subr.bf16.mxu0 %v480
    %608 = vmatpush1.bf16.msra.mxu0 %v479
    %609 = vmatprep.mubr.bf16.mxu0 %v178
    %610 = vmatmul.mubr.bf16.gmra.mrb[0].mxu0 %v177
    %v611 = vpop.f32.mrb[0].mxu0
    %v612 = vadd.f32 %v250, %v611
    %v613 = vpop.f32.mrb[0].mxu0
    %v614 = vadd.f32 %v254, %v613
    %v615 = vpop.f32.mrb[0].mxu0
    %v616 = vpop.f32.mrb[0].mxu0
    %617 = vdwg.mxu0
    %618 = vmatprep.subr.bf16.mxu0 %v482
    %619 = vmatpush1.bf16.msra.mxu0 %v481
    %620 = vmatprep.subr.bf16.mxu0 %v484
    %621 = vmatpush1.bf16.msra.mxu0 %v483
    %622 = vmatprep.subr.bf16.mxu0 %v486
    %623 = vmatpush1.bf16.msra.mxu0 %v485
    %624 = vmatprep.subr.bf16.mxu0 %v488
    %625 = vmatpush1.bf16.msra.mxu0 %v487
    %626 = vmatprep.subr.bf16.mxu0 %v490
    %627 = vmatpush1.bf16.msra.mxu0 %v489
    %628 = vmatprep.subr.bf16.mxu0 %v492
    %629 = vmatpush1.bf16.msra.mxu0 %v491
    %630 = vmatprep.subr.bf16.mxu0 %v494
    %631 = vmatpush1.bf16.msra.mxu0 %v493
    %632 = vmatprep.subr.bf16.mxu0 %v496
    %633 = vmatpush1.bf16.msra.mxu0 %v495
    %634 = vmatprep.subr.bf16.mxu0 %v498
    %635 = vmatpush1.bf16.msra.mxu0 %v497
    %636 = vmatprep.subr.bf16.mxu0 %v500
    %637 = vmatpush1.bf16.msra.mxu0 %v499
    %638 = vmatprep.subr.bf16.mxu0 %v502
    %639 = vmatpush1.bf16.msra.mxu0 %v501
    %640 = vmatprep.subr.bf16.mxu0 %v504
    %641 = vmatpush1.bf16.msra.mxu0 %v503
    %642 = vmatprep.subr.bf16.mxu0 %v506
    %643 = vmatpush1.bf16.msra.mxu0 %v505
    %644 = vmatprep.subr.bf16.mxu0 %v508
    %645 = vmatpush1.bf16.msra.mxu0 %v507
    %646 = vmatprep.subr.bf16.mxu0 %v510
    %647 = vmatpush1.bf16.msra.mxu0 %v509
    %648 = vmatprep.subr.bf16.mxu0 %v512
    %649 = vmatpush1.bf16.msra.mxu0 %v511
    %650 = vmatprep.mubr.bf16.mxu0 %v180
    %651 = vmatmul.mubr.bf16.gmra.mrb[0].mxu0 %v179
    %v652 = vpop.f32.mrb[0].mxu0
    %v653 = vadd.f32 %v612, %v652
    %v654 = vpop.f32.mrb[0].mxu0
    %v655 = vadd.f32 %v614, %v654
    %v656 = vpop.f32.mrb[0].mxu0
    %v657 = vpop.f32.mrb[0].mxu0
    %658 = vdwg.mxu0
    %v659 = vmax.f32 %v653, 0.0
    %v660 = vmax.f32 %v655, 0.0
    %v661 = vpack.c.bf16 %v659, %v659
    %v662 = vpack.c.bf16 %v660, %v660
    %v663 = vld [vmem:[%s5] sm:$0xff]
    %v664 = vld [vmem:[%s5 + $0x8] sm:$0xff]
    %v665 = vld [vmem:[%s5 + $0x10] sm:$0xff]
    %v666 = vld [vmem:[%s5 + $0x18] sm:$0xff]
    %v667 = vld [vmem:[%s5 + $0x20] sm:$0xff]
    %v668 = vld [vmem:[%s5 + $0x28] sm:$0xff]
    %v669 = vld [vmem:[%s5 + $0x30] sm:$0xff]
    %v670 = vld [vmem:[%s5 + $0x38] sm:$0xff]
    %v671 = vld [vmem:[%s5 + $0x40] sm:$0xff]
    %v672 = vld [vmem:[%s5 + $0x48] sm:$0xff]
    %v673 = vld [vmem:[%s5 + $0x50] sm:$0xff]
    %v674 = vld [vmem:[%s5 + $0x58] sm:$0xff]
    %v675 = vld [vmem:[%s5 + $0x60] sm:$0xff]
    %v676 = vld [vmem:[%s5 + $0x68] sm:$0xff]
    %v677 = vld [vmem:[%s5 + $0x70] sm:$0xff]
    %v678 = vld [vmem:[%s5 + $0x78] sm:$0xff]
    %v679 = vld [vmem:[%s5 + $0x80] sm:$0xff]
    %v680 = vld [vmem:[%s5 + $0x88] sm:$0xff]
    %v681 = vld [vmem:[%s5 + $0x90] sm:$0xff]
    %v682 = vld [vmem:[%s5 + $0x98] sm:$0xff]
    %v683 = vld [vmem:[%s5 + $0xa0] sm:$0xff]
    %v684 = vld [vmem:[%s5 + $0xa8] sm:$0xff]
    %v685 = vld [vmem:[%s5 + $0xb0] sm:$0xff]
    %v686 = vld [vmem:[%s5 + $0xb8] sm:$0xff]
    %v687 = vld [vmem:[%s5 + $0xc0] sm:$0xff]
    %v688 = vld [vmem:[%s5 + $0xc8] sm:$0xff]
    %v689 = vld [vmem:[%s5 + $0xd0] sm:$0xff]
    %v690 = vld [vmem:[%s5 + $0xd8] sm:$0xff]
    %v691 = vld [vmem:[%s5 + $0xe0] sm:$0xff]
    %v692 = vld [vmem:[%s5 + $0xe8] sm:$0xff]
    %v693 = vld [vmem:[%s5 + $0xf0] sm:$0xff]
    %v694 = vld [vmem:[%s5 + $0xf8] sm:$0xff]
    %v695 = vld [vmem:[%s6] sm:$0x3]
    %v697 = vlaneseq
    %v698 = vshrl.u32 %v697, 7
    %v699 = vsub.s32 0, %v698
    %v700 = vrot.slane %v695, %v699
    %v701 = vlaneseq
    %v702 = vshrl.u32 %v701, 7
    %v703 = vsub.s32 1, %v702
    %v704 = vrot.slane %v695, %v703
    %v739 = vunpack.c.l.b16 %v663
    %v740 = vunpack.c.h.b16 %v663
    %v741 = vunpack.c.l.b16 %v664
    %v742 = vunpack.c.h.b16 %v664
    %v743 = vunpack.c.l.b16 %v665
    %v744 = vunpack.c.h.b16 %v665
    %v745 = vunpack.c.l.b16 %v666
    %v746 = vunpack.c.h.b16 %v666
    %v747 = vunpack.c.l.b16 %v667
    %v748 = vunpack.c.h.b16 %v667
    %v749 = vunpack.c.l.b16 %v668
    %v750 = vunpack.c.h.b16 %v668
    %v751 = vunpack.c.l.b16 %v669
    %v752 = vunpack.c.h.b16 %v669
    %v753 = vunpack.c.l.b16 %v670
    %v754 = vunpack.c.h.b16 %v670
    %v755 = vunpack.c.l.b16 %v671
    %v756 = vunpack.c.h.b16 %v671
    %v757 = vunpack.c.l.b16 %v672
    %v758 = vunpack.c.h.b16 %v672
    %v759 = vunpack.c.l.b16 %v673
    %v760 = vunpack.c.h.b16 %v673
    %v761 = vunpack.c.l.b16 %v674
    %v762 = vunpack.c.h.b16 %v674
    %v763 = vunpack.c.l.b16 %v675
    %v764 = vunpack.c.h.b16 %v675
    %v765 = vunpack.c.l.b16 %v676
    %v766 = vunpack.c.h.b16 %v676
    %v767 = vunpack.c.l.b16 %v677
    %v768 = vunpack.c.h.b16 %v677
    %v769 = vunpack.c.l.b16 %v678
    %v770 = vunpack.c.h.b16 %v678
    %v771 = vunpack.c.l.b16 %v679
    %v772 = vunpack.c.h.b16 %v679
    %v773 = vunpack.c.l.b16 %v680
    %v774 = vunpack.c.h.b16 %v680
    %v775 = vunpack.c.l.b16 %v681
    %v776 = vunpack.c.h.b16 %v681
    %v777 = vunpack.c.l.b16 %v682
    %v778 = vunpack.c.h.b16 %v682
    %v779 = vunpack.c.l.b16 %v683
    %v780 = vunpack.c.h.b16 %v683
    %v781 = vunpack.c.l.b16 %v684
    %v782 = vunpack.c.h.b16 %v684
    %v783 = vunpack.c.l.b16 %v685
    %v784 = vunpack.c.h.b16 %v685
    %v785 = vunpack.c.l.b16 %v686
    %v786 = vunpack.c.h.b16 %v686
    %v787 = vunpack.c.l.b16 %v687
    %v788 = vunpack.c.h.b16 %v687
    %v789 = vunpack.c.l.b16 %v688
    %v790 = vunpack.c.h.b16 %v688
    %v791 = vunpack.c.l.b16 %v689
    %v792 = vunpack.c.h.b16 %v689
    %v793 = vunpack.c.l.b16 %v690
    %v794 = vunpack.c.h.b16 %v690
    %v795 = vunpack.c.l.b16 %v691
    %v796 = vunpack.c.h.b16 %v691
    %v797 = vunpack.c.l.b16 %v692
    %v798 = vunpack.c.h.b16 %v692
    %v799 = vunpack.c.l.b16 %v693
    %v800 = vunpack.c.h.b16 %v693
    %v801 = vunpack.c.l.b16 %v694
    %v802 = vunpack.c.h.b16 %v694
    %v803 = vpack.c.b16 %v741, %v739
    %v804 = vpack.c.b16 %v742, %v740
    %v805 = vpack.c.b16 %v745, %v743
    %v806 = vpack.c.b16 %v746, %v744
    %v807 = vpack.c.b16 %v749, %v747
    %v808 = vpack.c.b16 %v750, %v748
    %v809 = vpack.c.b16 %v753, %v751
    %v810 = vpack.c.b16 %v754, %v752
    %v811 = vpack.c.b16 %v757, %v755
    %v812 = vpack.c.b16 %v758, %v756
    %v813 = vpack.c.b16 %v761, %v759
    %v814 = vpack.c.b16 %v762, %v760
    %v815 = vpack.c.b16 %v765, %v763
    %v816 = vpack.c.b16 %v766, %v764
    %v817 = vpack.c.b16 %v769, %v767
    %v818 = vpack.c.b16 %v770, %v768
    %v819 = vpack.c.b16 %v773, %v771
    %v820 = vpack.c.b16 %v774, %v772
    %v821 = vpack.c.b16 %v777, %v775
    %v822 = vpack.c.b16 %v778, %v776
    %v823 = vpack.c.b16 %v781, %v779
    %v824 = vpack.c.b16 %v782, %v780
    %v825 = vpack.c.b16 %v785, %v783
    %v826 = vpack.c.b16 %v786, %v784
    %v827 = vpack.c.b16 %v789, %v787
    %v828 = vpack.c.b16 %v790, %v788
    %v829 = vpack.c.b16 %v793, %v791
    %v830 = vpack.c.b16 %v794, %v792
    %v831 = vpack.c.b16 %v797, %v795
    %v832 = vpack.c.b16 %v798, %v796
    %v833 = vpack.c.b16 %v801, %v799
    %v834 = vpack.c.b16 %v802, %v800
    %867 = vmatprep.subr.bf16.mxu0 %v804
    %868 = vmatpush1.bf16.msra.mxu0 %v803
    %869 = vmatprep.subr.bf16.mxu0 %v806
    %870 = vmatpush1.bf16.msra.mxu0 %v805
    %871 = vmatprep.subr.bf16.mxu0 %v808
    %872 = vmatpush1.bf16.msra.mxu0 %v807
    %873 = vmatprep.subr.bf16.mxu0 %v810
    %874 = vmatpush1.bf16.msra.mxu0 %v809
    %875 = vmatprep.subr.bf16.mxu0 %v812
    %876 = vmatpush1.bf16.msra.mxu0 %v811
    %877 = vmatprep.subr.bf16.mxu0 %v814
    %878 = vmatpush1.bf16.msra.mxu0 %v813
    %879 = vmatprep.subr.bf16.mxu0 %v816
    %880 = vmatpush1.bf16.msra.mxu0 %v815
    %881 = vmatprep.subr.bf16.mxu0 %v818
    %882 = vmatpush1.bf16.msra.mxu0 %v817
    %883 = vmatprep.subr.bf16.mxu0 %v820
    %884 = vmatpush1.bf16.msra.mxu0 %v819
    %885 = vmatprep.subr.bf16.mxu0 %v822
    %886 = vmatpush1.bf16.msra.mxu0 %v821
    %887 = vmatprep.subr.bf16.mxu0 %v824
    %888 = vmatpush1.bf16.msra.mxu0 %v823
    %889 = vmatprep.subr.bf16.mxu0 %v826
    %890 = vmatpush1.bf16.msra.mxu0 %v825
    %891 = vmatprep.subr.bf16.mxu0 %v828
    %892 = vmatpush1.bf16.msra.mxu0 %v827
    %893 = vmatprep.subr.bf16.mxu0 %v830
    %894 = vmatpush1.bf16.msra.mxu0 %v829
    %895 = vmatprep.subr.bf16.mxu0 %v832
    %896 = vmatpush1.bf16.msra.mxu0 %v831
    %897 = vmatprep.subr.bf16.mxu0 %v834
    %898 = vmatpush1.bf16.msra.mxu0 %v833
    %899 = vmatprep.mubr.bf16.mxu0 %v662
    %900 = vmatmul.mubr.bf16.gmra.mrb[0].mxu0 %v661
    %v901 = vpop.f32.mrb[0].mxu0
    %v902 = vadd.f32 %v700, %v901
    %v903 = vpop.f32.mrb[0].mxu0
    %v904 = vadd.f32 %v704, %v903
    %v905 = vpop.f32.mrb[0].mxu0
    %v906 = vpop.f32.mrb[0].mxu0
    %907 = vdwg.mxu0
    %908 = vst [vmem:[#allocation2] sm:$0xff] %v902
    %909 = vst [vmem:[#allocation2 + $0x8] sm:$0xff] %v904
    // Predicated region
    $region30: #{net_forward.1} parent=1 // pred_check
      _
    $region31: #{net_forward.1} parent=1 // pred_check_branch
      %911 = sbr.rel (0) target = $region33
    $region32: #{net_forward.1} parent=1 // pred_region
      %s913 = ssub.s32 256, 256
      %914 = vsyncadd [#allocation3], %s913
      %s916 = sshll.u32 [#allocation2], 4
      %s917 = int_to_ptr.vmem [resolvable:$true] %s916
      %919 = dma.vmem_to_hbm [thread:$0]  %s917, 256, %s7, [#allocation3]
    $region33: #{net_forward.1} parent=1 // pred_fallthru
      _
    // Predicated region
    $region34: #{net_forward.1} parent=1 // pred_check
      _
    $region35: #{net_forward.1} parent=1 // pred_check_branch
      %921 = sbr.rel (0) target = $region37
    $region36: #{net_forward.1} parent=1 // pred_region
      %922 = dma.done [#allocation3], 256
    $region37: #{net_forward.1} parent=1 // pred_fallthru
      _
    %923 = vsyncpa [#allocation3], 1

</llo_original>
